<compile_context>
chip_gen: v6e
topology: v6e:2x2x1
jax: 0.10.0
libtpu: 0.0.40
codegen_flags: <defaults>
</compile_context>

<pallas_src>
import jax
import jax.numpy as jnp
from jax.experimental import pallas as pl
from jax.experimental.pallas import tpu as pltpu


# ---------------------------------------------------------------------------
# Hot path: IdentityLayer.forward() semantics == "return self.weight".
# ---------------------------------------------------------------------------
def identity_layer_forward(weight: jax.Array) -> jax.Array:
    """Exact IdentityLayer.forward(): returns the parameter itself (no copy).

    Deliberately NOT a pallas_call: an aliased identity kernel adds only
    launch overhead and requires the caller to donate `weight` to avoid a
    hidden defensive full copy.  The module's forward is a pure passthrough.
    """
    return weight


# ---------------------------------------------------------------------------
# Pallas path: materialize a fresh buffer bit-identical to `weight`, via one
# direct HBM->HBM DMA (no VMEM staging, no grid, no tiling).
# ---------------------------------------------------------------------------
def _identity_copy_dma_kernel(w_hbm_ref, o_hbm_ref, sem):
    cp = pltpu.make_async_copy(w_hbm_ref, o_hbm_ref, sem)
    cp.start()
    cp.wait()


def identity_layer_forward_pallas(weight: jax.Array) -> jax.Array:
    """IdentityLayer.forward() that materializes a fresh copy of `weight`.

    Both refs stay in HBM (memory_space=pl.ANY); the body issues a single
    async copy straight HBM->HBM.  Works for any shape/dtype with zero
    lane/sublane alignment or scoped-VMEM concerns on v5e / v6e / v7x.
    """
    return pl.pallas_call(
        _identity_copy_dma_kernel,
        out_shape=jax.ShapeDtypeStruct(weight.shape, weight.dtype),
        in_specs=[pl.BlockSpec(memory_space=pl.ANY)],   # raw HBM ref, no auto-DMA
        out_specs=pl.BlockSpec(memory_space=pl.ANY),    # raw HBM ref, DMA target
        scratch_shapes=[pltpu.SemaphoreType.DMA(())],
    )(weight)


# ---------------------------------------------------------------------------
# Helpers / demo / correctness check
# ---------------------------------------------------------------------------
def make_identity_layer_weight(size, scale=1.0, seed=0):
    """Deterministic stand-in for `scale * torch.randn(size)`."""
    key = jax.random.PRNGKey(seed)
    return scale * jax.random.normal(key, size, dtype=jnp.float32)


if __name__ == "__main__":
    scale = 2.0

    # Small shapes consistent with the original tests.
    weight_small = make_identity_layer_weight((16, 32), scale=scale, seed=0)
    # Lane-dense shape (8 sublanes x 128 lanes) -- trivially handled by the DMA.
    weight_dense = make_identity_layer_weight((8, 128), scale=scale, seed=0)
    # Odd 1-D size not divisible by 128 -- the DMA path needs no reshape fallback.
    weight_odd = make_identity_layer_weight((257,), scale=scale, seed=0)

    # Hot path: pure passthrough (identical semantics to PyTorch's forward).
    out = identity_layer_forward(weight_small)
    assert out.shape == weight_small.shape and out.dtype == weight_small.dtype
    assert bool(jnp.array_equal(out, weight_small)), "passthrough identity mismatch"

    # Pallas HBM->HBM DMA copy path.
    for w in (weight_small, weight_dense, weight_odd):
        out_copy = jax.block_until_ready(identity_layer_forward_pallas(w))
        assert out_copy.shape == w.shape and out_copy.dtype == w.dtype
        assert bool(jnp.array_equal(out_copy, w)), f"DMA copy mismatch for shape {w.shape}"

    print("KERNEL_OK")
</pallas_src>

<mosaic_0001>
module attributes {stable_mosaic.version = 11 : i64} {
  func.func @_identity_copy_dma_kernel(%arg0: memref<16x32xf32, #tpu.memory_space<any>>, %arg1: memref<16x32xf32, #tpu.memory_space<any>>, %arg2: memref<!tpu.dma_semaphore, #tpu.memory_space<semaphore_mem>>) attributes {dimension_semantics = [], scalar_prefetch = 0 : i64, scratch_operands = 1 : i64, tpu.core_type = #tpu.core_type<tc>} {
    tpu.enqueue_dma source(%arg0 : memref<16x32xf32, #tpu.memory_space<any>>) target(%arg1 : memref<16x32xf32, #tpu.memory_space<any>>) target_semaphore(%arg2 : memref<!tpu.dma_semaphore, #tpu.memory_space<semaphore_mem>>)
    tpu.wait_dma2 semaphore(%arg2 : memref<!tpu.dma_semaphore, #tpu.memory_space<semaphore_mem>>) src(%arg0 : memref<16x32xf32, #tpu.memory_space<any>>) dst(%arg1 : memref<16x32xf32, #tpu.memory_space<any>>)
    return
  }
}

</mosaic_0001>

<llo_original>
// kernel: tpu_custom_call.1
$region0: #{tpu_custom_call.1}
  #allocation0 [shape = 'u32[]', space=smem, size = 0x4, offset = 0x4, fixed_abs, tag = 'smem constant byte address 0x4 - core index']
  #allocation1 [shape = 'u32[144,128]{1,0:T(1,128)}', space=vmem, size = 0x12000, scoped, tag = 'internal scratch']
  #allocation2 [shape = 's32[1]{0}', space=sflag, size = 0x4, scoped, tag = 'scratch operand']
  #allocation3 [shape = 's32[]', space=sflag, size = 0x4, offset = 0, fixed_abs, tag = 'sflag constant byte address 0x0 - dummy sync flag']
  #allocation4 [shape = 'u32[0]{0}', space=smem, size = 0, offset = 0, fixed_abs, tag = 'smem constant byte address 0x0 - null']
  %s0 = inlined_call_operand.hbm [shape: f32[16,32], index: 0, kind: input, shape index: {}]
  %s1 = inlined_call_operand.hbm [shape: f32[16,32], index: 1, kind: output, shape index: {}]
  %s2 = sld [smem:[#allocation0]]
  $region2: #{tpu_custom_call.1} parent=0
    _
  %s4 = ssub.s32 1, %s2
  %s5 = scalar_select 0, %s4, %s2
  %s7 = sshll.u32 1, 14
  %s8 = sxor.u32 4294967295, %s7
  %12 = dma.general %s0, 256, %s1, [#allocation2], 131072, [#allocation4], 0, 0
  %s13 = smul.u32 16, 1
  %s14 = sshll.u32 %s13, 4
  %15 = dma.done [#allocation2], %s14
  %16 = vsyncmov [#allocation2]
  %s17 = vpop.sfrf %16
  %p18 = scmp.eq.s32.totalorder %s17, 0
  %p19 = pneg %p18
  %21 = shalt.err (%p19)

</llo_original>
